<compile_context>
chip_gen: v7x
topology: tpu7x:2x2x1
jax: 0.10.0
libtpu: 0.0.40
codegen_flags: <defaults>
</compile_context>

<pallas_src>
import jax
import jax.numpy as jnp
from jax.experimental import pallas as pl
from jax.experimental.pallas import tpu as pltpu

HIDDEN = 32          # hidden width of the synthetic t_net / m_net MLPs
MAX_TILE_P = 32768   # pixels per grid step (lane axis), multiple of 128


def _round_up(x, m):
    return ((x + m - 1) // m) * m


def _net_kernel(x_ref,
                w13_ref, b13_ref,       # stacked t_net/m_net first layer (bf16 w, f32 b)
                w2_ref, b2_ref,         # t_net head (bf16 w, f32 b)
                w3s_ref,                # m_net softmax-branch weights (bf16)
                w4c_ref, b4_ref,        # m_net head as a broadcast column (f32)
                trimap_ref, alpha_ref):
    x = x_ref[0].astype(jnp.float32)                                      # (3, TP)

    # ---- stacked first layer: [w1 ; w3_x] @ x, biases [b1 ; b3] added once --
    h_both = jnp.dot(w13_ref[...], x.astype(jnp.bfloat16),
                     preferred_element_type=jnp.float32) + b13_ref[...]   # (2H, TP)
    h1 = jnp.maximum(h_both[:HIDDEN], 0.0)                                # (H, TP)
    pre2 = h_both[HIDDEN:]                                                # (H, TP), b3 included

    # ---- t_net output: 3-channel trimap (pre-softmax, returned as-is) -------
    trimap = jnp.dot(w2_ref[...], h1.astype(jnp.bfloat16),
                     preferred_element_type=jnp.float32) + b2_ref[...]    # (3, TP)

    # ---- softmax over channel axis (PyTorch dim=1 == axis 0 here), exact ----
    t_max = jnp.max(trimap, axis=0, keepdims=True)
    t_exp = jnp.exp(trimap - t_max)
    denom = jnp.sum(t_exp, axis=0, keepdims=True)
    sm = t_exp / denom                                                    # (3, TP)

    # ---- m_net on cat(x, sm): concat fused away via split weights ----------
    h2 = jnp.maximum(
        pre2 + jnp.dot(w3s_ref[...], sm.astype(jnp.bfloat16),
                       preferred_element_type=jnp.float32), 0.0)          # (H, TP)

    # ---- 1-row head on VPU + XLU (off the MXU): alpha_r = w4 . h2 + b4 -----
    alpha_r = jnp.sum(w4c_ref[...] * h2, axis=0, keepdims=True) \
        + b4_ref[...]                                                     # (1, TP)

    # ---- fusion: bg, fg, unsure = split(sm); alpha_p = fg + unsure*alpha_r --
    alpha_p = sm[1:2] + sm[2:3] * alpha_r                                 # (1, TP)

    trimap_ref[0] = trimap.astype(trimap_ref.dtype)
    alpha_ref[0] = alpha_p.astype(alpha_ref.dtype)


def _param_spec(shape):
    # whole (tiny) parameter array resident in VMEM, same block every step
    return pl.BlockSpec(shape, lambda ni, ti: tuple(0 for _ in shape))


@jax.jit
def net_forward(x_nchw, params):
    """x_nchw: (N, 3, H, W) float32 -> (trimap (N,3,H,W), alpha_p (N,1,H,W))."""
    n, c, h, w = x_nchw.shape
    assert c == 3
    hw = h * w

    # channels-major, transpose-free: (N, 3, H*W)
    x_flat = x_nchw.reshape(n, c, hw)

    # padding-minimizing tile choice: spread pixels evenly over the needed tiles
    n_tiles = -(-hw // MAX_TILE_P)                  # cdiv
    tile_p = _round_up(-(-hw // n_tiles), 128)
    hw_pad = n_tiles * tile_p
    if hw_pad != hw:
        x_flat = jnp.pad(x_flat, ((0, 0), (0, 0), (0, hw_pad - hw)))

    w1, b1, w2, b2, w3, b3, w4, b4 = params
    # fuse the channel concat: m_net first layer = w3_x @ x + w3_sm @ sm
    w13 = jnp.concatenate([w1, w3[:, :3]], axis=0).astype(jnp.bfloat16)   # (2H, 3)
    b13 = jnp.concatenate([b1, b3], axis=0)                               # (2H, 1) f32
    w2b = w2.astype(jnp.bfloat16)                                         # (3, H)
    w3s = w3[:, 3:6].astype(jnp.bfloat16)                                 # (H, 3)
    w4c = w4.reshape(HIDDEN, 1)                                           # (H, 1) f32, VPU head

    grid = (n, n_tiles)
    trimap_pad, alpha_pad = pl.pallas_call(
        _net_kernel,
        out_shape=(jax.ShapeDtypeStruct((n, 3, hw_pad), jnp.float32),
                   jax.ShapeDtypeStruct((n, 1, hw_pad), jnp.float32)),
        grid_spec=pltpu.PrefetchScalarGridSpec(
            num_scalar_prefetch=0,
            grid=grid,
            in_specs=[
                pl.BlockSpec((1, 3, tile_p), lambda ni, ti: (ni, 0, ti)),
                _param_spec(w13.shape), _param_spec(b13.shape),
                _param_spec(w2b.shape), _param_spec(b2.shape),
                _param_spec(w3s.shape),
                _param_spec(w4c.shape), _param_spec(b4.shape),
            ],
            out_specs=[
                pl.BlockSpec((1, 3, tile_p), lambda ni, ti: (ni, 0, ti)),
                pl.BlockSpec((1, 1, tile_p), lambda ni, ti: (ni, 0, ti)),
            ],
        ),
        compiler_params=pltpu.CompilerParams(
            dimension_semantics=("parallel", "parallel"),
            vmem_limit_bytes=48 * 1024 * 1024),
    )(x_flat, w13, b13, w2b, b2, w3s, w4c, b4)

    trimap = trimap_pad[:, :, :hw].reshape(n, 3, h, w)
    alpha_p = alpha_pad[:, :, :hw].reshape(n, 1, h, w)
    return trimap, alpha_p


def init_params(key):
    ks = jax.random.split(key, 8)
    s = 0.1
    w1 = s * jax.random.normal(ks[0], (HIDDEN, 3), jnp.float32)
    b1 = 0.05 * jax.random.normal(ks[1], (HIDDEN, 1), jnp.float32)
    w2 = s * jax.random.normal(ks[2], (3, HIDDEN), jnp.float32)
    b2 = 0.05 * jax.random.normal(ks[3], (3, 1), jnp.float32)
    w3 = s * jax.random.normal(ks[4], (HIDDEN, 6), jnp.float32)
    b3 = 0.05 * jax.random.normal(ks[5], (HIDDEN, 1), jnp.float32)
    w4 = s * jax.random.normal(ks[6], (1, HIDDEN), jnp.float32)
    b4 = 0.05 * jax.random.normal(ks[7], (1, 1), jnp.float32)
    return (w1, b1, w2, b2, w3, b3, w4, b4)


def _reference(x_nchw, params):
    """Plain-JAX f32 reference of the same forward, for a sanity check."""
    w1, b1, w2, b2, w3, b3, w4, b4 = params
    n, c, h, w = x_nchw.shape
    x = x_nchw.reshape(n, c, h * w)                               # (N, 3, HW)
    h1 = jnp.maximum(jnp.einsum("oc,ncp->nop", w1, x) + b1[None], 0.0)
    trimap = jnp.einsum("oc,ncp->nop", w2, h1) + b2[None]
    sm = jax.nn.softmax(trimap, axis=1)
    m_in = jnp.concatenate([x, sm], axis=1)
    h2 = jnp.maximum(jnp.einsum("oc,ncp->nop", w3, m_in) + b3[None], 0.0)
    alpha_r = jnp.einsum("oc,ncp->nop", w4, h2) + b4[None]
    alpha_p = sm[:, 1:2] + sm[:, 2:3] * alpha_r
    return trimap.reshape(n, 3, h, w), alpha_p.reshape(n, 1, h, w)


if __name__ == "__main__":
    key = jax.random.PRNGKey(0)
    k_x, k_p = jax.random.split(key)

    # small, module-consistent shapes: batch=2, RGB input, 16x16 spatial
    x = jax.random.normal(k_x, (2, 3, 16, 16), jnp.float32)
    params = init_params(k_p)

    trimap, alpha_p = net_forward(x, params)
    jax.block_until_ready((trimap, alpha_p))

    ref_trimap, ref_alpha = _reference(x, params)
    assert trimap.shape == (2, 3, 16, 16)
    assert alpha_p.shape == (2, 1, 16, 16)
    # bf16 MXU operands (f32 accumulate) -> modestly relaxed tolerance
    assert jnp.allclose(trimap, ref_trimap, atol=2e-2, rtol=2e-2)
    assert jnp.allclose(alpha_p, ref_alpha, atol=2e-2, rtol=2e-2)

    print("KERNEL_OK")
</pallas_src>

<mosaic_0001>
module attributes {stable_mosaic.version = 11 : i64} {
  func.func @_net_kernel(%arg0: i32, %arg1: i32, %arg2: memref<1x3x256xf32, #tpu.memory_space<vmem>>, %arg3: memref<64x3xbf16, #tpu.memory_space<vmem>>, %arg4: memref<64x1xf32, #tpu.memory_space<vmem>>, %arg5: memref<3x32xbf16, #tpu.memory_space<vmem>>, %arg6: memref<3x1xf32, #tpu.memory_space<vmem>>, %arg7: memref<32x3xbf16, #tpu.memory_space<vmem>>, %arg8: memref<32x1xf32, #tpu.memory_space<vmem>>, %arg9: memref<1x1xf32, #tpu.memory_space<vmem>>, %arg10: memref<1x3x256xf32, #tpu.memory_space<vmem>>, %arg11: memref<1x1x256xf32, #tpu.memory_space<vmem>>) attributes {dimension_semantics = [#tpu.dimension_semantics<parallel>, #tpu.dimension_semantics<parallel>], iteration_bounds = array<i64: 2, 1>, scalar_prefetch = 0 : i64, scratch_operands = 0 : i64, tpu.core_type = #tpu.core_type<tc>, window_params = [{transform_indices = @transform_0, window_bounds = array<i64: 1, 3, 256>}, {pipeline_mode = #tpu.pipeline_mode<synchronous>, transform_indices = @transform_1, window_bounds = array<i64: 64, 3>}, {pipeline_mode = #tpu.pipeline_mode<synchronous>, transform_indices = @transform_2, window_bounds = array<i64: 64, 1>}, {pipeline_mode = #tpu.pipeline_mode<synchronous>, transform_indices = @transform_3, window_bounds = array<i64: 3, 32>}, {pipeline_mode = #tpu.pipeline_mode<synchronous>, transform_indices = @transform_4, window_bounds = array<i64: 3, 1>}, {pipeline_mode = #tpu.pipeline_mode<synchronous>, transform_indices = @transform_5, window_bounds = array<i64: 32, 3>}, {pipeline_mode = #tpu.pipeline_mode<synchronous>, transform_indices = @transform_6, window_bounds = array<i64: 32, 1>}, {pipeline_mode = #tpu.pipeline_mode<synchronous>, transform_indices = @transform_7, window_bounds = array<i64: 1, 1>}, {transform_indices = @transform_8, window_bounds = array<i64: 1, 3, 256>}, {transform_indices = @transform_9, window_bounds = array<i64: 1, 1, 256>}]} {
    %c0 = arith.constant 0 : index
    %c0_0 = arith.constant 0 : index
    %c0_1 = arith.constant 0 : index
    %0 = vector.load %arg2[%c0, %c0_0, %c0_1] : memref<1x3x256xf32, #tpu.memory_space<vmem>>, vector<1x3x256xf32>
    %1 = vector.shape_cast %0 : vector<1x3x256xf32> to vector<3x256xf32>
    %c0_2 = arith.constant 0 : index
    %c0_3 = arith.constant 0 : index
    %2 = vector.load %arg3[%c0_2, %c0_3] : memref<64x3xbf16, #tpu.memory_space<vmem>>, vector<64x3xbf16>
    %3 = arith.truncf %1 : vector<3x256xf32> to vector<3x256xbf16>
    %cst = arith.constant dense<0.000000e+00> : vector<64x256xf32>
    %4 = tpu.matmul %2, %3, %cst {dimension_numbers = #tpu.dot_dimension_numbers<[1], [0], [0], [1], [0, 0, 1, 1], [], []>} : vector<64x3xbf16>, vector<3x256xbf16>, vector<64x256xf32> -> vector<64x256xf32>
    %c0_4 = arith.constant 0 : index
    %c0_5 = arith.constant 0 : index
    %5 = vector.load %arg4[%c0_4, %c0_5] : memref<64x1xf32, #tpu.memory_space<vmem>>, vector<64x1xf32>
    %6 = vector.broadcast %5 : vector<64x1xf32> to vector<64x256xf32>
    %7 = arith.addf %4, %6 : vector<64x256xf32>
    %8 = vector.extract_strided_slice %7 {offsets = [0, 0], sizes = [32, 256], strides = [1, 1]} : vector<64x256xf32> to vector<32x256xf32>
    %cst_6 = arith.constant 0.000000e+00 : f32
    %9 = vector.broadcast %cst_6 : f32 to vector<32x256xf32>
    %10 = arith.maximumf %8, %9 : vector<32x256xf32>
    %11 = vector.extract_strided_slice %7 {offsets = [32, 0], sizes = [32, 256], strides = [1, 1]} : vector<64x256xf32> to vector<32x256xf32>
    %c0_7 = arith.constant 0 : index
    %c0_8 = arith.constant 0 : index
    %12 = vector.load %arg5[%c0_7, %c0_8] : memref<3x32xbf16, #tpu.memory_space<vmem>>, vector<3x32xbf16>
    %13 = arith.truncf %10 : vector<32x256xf32> to vector<32x256xbf16>
    %cst_9 = arith.constant dense<0.000000e+00> : vector<3x256xf32>
    %14 = tpu.matmul %12, %13, %cst_9 {dimension_numbers = #tpu.dot_dimension_numbers<[1], [0], [0], [1], [0, 0, 1, 1], [], []>} : vector<3x32xbf16>, vector<32x256xbf16>, vector<3x256xf32> -> vector<3x256xf32>
    %c0_10 = arith.constant 0 : index
    %c0_11 = arith.constant 0 : index
    %15 = vector.load %arg6[%c0_10, %c0_11] : memref<3x1xf32, #tpu.memory_space<vmem>>, vector<3x1xf32>
    %16 = vector.broadcast %15 : vector<3x1xf32> to vector<3x256xf32>
    %17 = arith.addf %14, %16 : vector<3x256xf32>
    %cst_12 = arith.constant dense<0xFF800000> : vector<256xf32>
    %18 = vector.multi_reduction <maximumf>, %17, %cst_12 [0] : vector<3x256xf32> to vector<256xf32>
    %19 = vector.shape_cast %18 : vector<256xf32> to vector<1x256xf32>
    %20 = vector.broadcast %19 : vector<1x256xf32> to vector<3x256xf32>
    %21 = arith.subf %17, %20 : vector<3x256xf32>
    %22 = math.exp %21 : vector<3x256xf32>
    %cst_13 = arith.constant dense<0.000000e+00> : vector<256xf32>
    %23 = vector.multi_reduction <add>, %22, %cst_13 [0] : vector<3x256xf32> to vector<256xf32>
    %24 = vector.shape_cast %23 : vector<256xf32> to vector<1x256xf32>
    %25 = vector.broadcast %24 : vector<1x256xf32> to vector<3x256xf32>
    %26 = arith.divf %22, %25 : vector<3x256xf32>
    %c0_14 = arith.constant 0 : index
    %c0_15 = arith.constant 0 : index
    %27 = vector.load %arg7[%c0_14, %c0_15] : memref<32x3xbf16, #tpu.memory_space<vmem>>, vector<32x3xbf16>
    %28 = arith.truncf %26 : vector<3x256xf32> to vector<3x256xbf16>
    %cst_16 = arith.constant dense<0.000000e+00> : vector<32x256xf32>
    %29 = tpu.matmul %27, %28, %cst_16 {dimension_numbers = #tpu.dot_dimension_numbers<[1], [0], [0], [1], [0, 0, 1, 1], [], []>} : vector<32x3xbf16>, vector<3x256xbf16>, vector<32x256xf32> -> vector<32x256xf32>
    %30 = arith.addf %11, %29 : vector<32x256xf32>
    %cst_17 = arith.constant 0.000000e+00 : f32
    %31 = vector.broadcast %cst_17 : f32 to vector<32x256xf32>
    %32 = arith.maximumf %30, %31 : vector<32x256xf32>
    %c0_18 = arith.constant 0 : index
    %c0_19 = arith.constant 0 : index
    %33 = vector.load %arg8[%c0_18, %c0_19] : memref<32x1xf32, #tpu.memory_space<vmem>>, vector<32x1xf32>
    %34 = vector.broadcast %33 : vector<32x1xf32> to vector<32x256xf32>
    %35 = arith.mulf %34, %32 : vector<32x256xf32>
    %cst_20 = arith.constant dense<0.000000e+00> : vector<256xf32>
    %36 = vector.multi_reduction <add>, %35, %cst_20 [0] : vector<32x256xf32> to vector<256xf32>
    %37 = vector.shape_cast %36 : vector<256xf32> to vector<1x256xf32>
    %c0_21 = arith.constant 0 : index
    %c0_22 = arith.constant 0 : index
    %38 = vector.load %arg9[%c0_21, %c0_22] : memref<1x1xf32, #tpu.memory_space<vmem>>, vector<1x1xf32>
    %39 = vector.broadcast %38 : vector<1x1xf32> to vector<1x256xf32>
    %40 = arith.addf %37, %39 : vector<1x256xf32>
    %41 = vector.extract_strided_slice %26 {offsets = [1, 0], sizes = [1, 256], strides = [1, 1]} : vector<3x256xf32> to vector<1x256xf32>
    %42 = vector.extract_strided_slice %26 {offsets = [2, 0], sizes = [1, 256], strides = [1, 1]} : vector<3x256xf32> to vector<1x256xf32>
    %43 = arith.mulf %42, %40 : vector<1x256xf32>
    %44 = arith.addf %41, %43 : vector<1x256xf32>
    %c0_23 = arith.constant 0 : index
    %c0_24 = arith.constant 0 : index
    %c0_25 = arith.constant 0 : index
    %45 = vector.load %arg10[%c0_23, %c0_24, %c0_25] : memref<1x3x256xf32, #tpu.memory_space<vmem>>, vector<1x3x256xf32>
    %46 = vector.shape_cast %45 : vector<1x3x256xf32> to vector<3x256xf32>
    %47 = vector.shape_cast %17 : vector<3x256xf32> to vector<1x3x256xf32>
    tpu.vector_store %arg10[%c0_23, %c0_24, %c0_25], %47 {strides = array<i32>} : memref<1x3x256xf32, #tpu.memory_space<vmem>>, vector<1x3x256xf32>,
    %c0_26 = arith.constant 0 : index
    %c0_27 = arith.constant 0 : index
    %c0_28 = arith.constant 0 : index
    %48 = vector.load %arg11[%c0_26, %c0_27, %c0_28] : memref<1x1x256xf32, #tpu.memory_space<vmem>>, vector<1x1x256xf32>
    %49 = vector.shape_cast %48 : vector<1x1x256xf32> to vector<1x256xf32>
    %50 = vector.shape_cast %44 : vector<1x256xf32> to vector<1x1x256xf32>
    tpu.vector_store %arg11[%c0_26, %c0_27, %c0_28], %50 {strides = array<i32>} : memref<1x1x256xf32, #tpu.memory_space<vmem>>, vector<1x1x256xf32>,
    return
  }
  func.func @transform_0(%arg0: i32, %arg1: i32) -> (i32, i32, i32) {
    %c0_i32 = arith.constant 0 : i32
    %c0_i32_0 = arith.constant 0 : i32
    return %arg0, %c0_i32, %arg1 : i32, i32, i32
  }
  func.func @transform_1(%arg0: i32, %arg1: i32) -> (i32, i32) {
    %c0_i32 = arith.constant 0 : i32
    %c0_i32_0 = arith.constant 0 : i32
    %c0_i32_1 = arith.constant 0 : i32
    return %c0_i32, %c0_i32_0 : i32, i32
  }
  func.func @transform_2(%arg0: i32, %arg1: i32) -> (i32, i32) {
    %c0_i32 = arith.constant 0 : i32
    %c0_i32_0 = arith.constant 0 : i32
    %c0_i32_1 = arith.constant 0 : i32
    return %c0_i32, %c0_i32_0 : i32, i32
  }
  func.func @transform_3(%arg0: i32, %arg1: i32) -> (i32, i32) {
    %c0_i32 = arith.constant 0 : i32
    %c0_i32_0 = arith.constant 0 : i32
    %c0_i32_1 = arith.constant 0 : i32
    return %c0_i32, %c0_i32_0 : i32, i32
  }
  func.func @transform_4(%arg0: i32, %arg1: i32) -> (i32, i32) {
    %c0_i32 = arith.constant 0 : i32
    %c0_i32_0 = arith.constant 0 : i32
    %c0_i32_1 = arith.constant 0 : i32
    return %c0_i32, %c0_i32_0 : i32, i32
  }
  func.func @transform_5(%arg0: i32, %arg1: i32) -> (i32, i32) {
    %c0_i32 = arith.constant 0 : i32
    %c0_i32_0 = arith.constant 0 : i32
    %c0_i32_1 = arith.constant 0 : i32
    return %c0_i32, %c0_i32_0 : i32, i32
  }
  func.func @transform_6(%arg0: i32, %arg1: i32) -> (i32, i32) {
    %c0_i32 = arith.constant 0 : i32
    %c0_i32_0 = arith.constant 0 : i32
    %c0_i32_1 = arith.constant 0 : i32
    return %c0_i32, %c0_i32_0 : i32, i32
  }
  func.func @transform_7(%arg0: i32, %arg1: i32) -> (i32, i32) {
    %c0_i32 = arith.constant 0 : i32
    %c0_i32_0 = arith.constant 0 : i32
    %c0_i32_1 = arith.constant 0 : i32
    return %c0_i32, %c0_i32_0 : i32, i32
  }
  func.func @transform_8(%arg0: i32, %arg1: i32) -> (i32, i32, i32) {
    %c0_i32 = arith.constant 0 : i32
    %c0_i32_0 = arith.constant 0 : i32
    return %arg0, %c0_i32, %arg1 : i32, i32, i32
  }
  func.func @transform_9(%arg0: i32, %arg1: i32) -> (i32, i32, i32) {
    %c0_i32 = arith.constant 0 : i32
    %c0_i32_0 = arith.constant 0 : i32
    return %arg0, %c0_i32, %arg1 : i32, i32, i32
  }
}

</mosaic_0001>

<llo_original>
// kernel: net_forward.1
$region0: #{net_forward.1}
  #allocation0 [shape = 'u32[]', space=smem, size = 0x4, offset = 0x4, fixed_abs, tag = 'smem constant byte address 0x4 - core index']
  #allocation1 [shape = 'u32[144,128]{1,0:T(1,128)}', space=vmem, size = 0x12000, scoped, tag = 'internal scratch']
  #allocation2 [shape = 'f32[1,1]{1,0:T(1,128)S(1)}', space=vmem, size = 0x200, scoped, tag = 'scoped memory for net_forward.1']
  %s0 = inlined_call_operand.vmem [shape: f32[2,3,256], index: 0, kind: input, shape index: {}]
  %s1 = inlined_call_operand.vmem [shape: bf16[64,3], index: 1, kind: input, shape index: {}]
  %s2 = inlined_call_operand.vmem [shape: f32[64,1], index: 2, kind: input, shape index: {}]
  %s3 = inlined_call_operand.vmem [shape: bf16[3,32], index: 3, kind: input, shape index: {}]
  %s4 = inlined_call_operand.vmem [shape: f32[3,1], index: 4, kind: input, shape index: {}]
  %s5 = inlined_call_operand.vmem [shape: bf16[32,3], index: 5, kind: input, shape index: {}]
  %s6 = inlined_call_operand.vmem [shape: f32[32,1], index: 6, kind: input, shape index: {}]
  %s7 = inlined_call_operand.<no memory space> [shape: f32[1,1], index: 7, kind: input, shape index: {}]
  %s8 = inlined_call_operand.vmem [shape: f32[2,3,256], index: 8, kind: output, shape index: {0}]
  %s9 = inlined_call_operand.vmem [shape: f32[2,1,256], index: 9, kind: output, shape index: {1}]
  %10 = xla_tuple %s8, %s9
  %s11 = sld [smem:[#allocation0]]
  $region73: #{net_forward.1} parent=0
    _
  %s13 = ssub.s32 1, %s11
  %s14 = scalar_select 0, %s13, %s11
  %v15 = vstv %s7
  %16 = vst [vmem:[#allocation2] sm:$0x1] %v15
  loop: start=0, step=1, limit=4
  $region2: #{net_forward.1} parent=0 // loop_pre_header
    _
  $region3: #{net_forward.1} parent=0 // loop_header
    %s18 = sphi 0, %s22
    %p19 = scmp.ge.s32.totalorder %s18, 4
    %s25 = sphi 0, %s37
    %s26 = sphi 0, %s33
    %s27 = sphi 0, %s25
    %s28 = sphi 0, %s26
    %s29 = sphi 0, %s27
    %s30 = sphi 0, %s28
    %s42 = sphi 0, %s44
    %s45 = sphi 0, %s42
    %s46 = sphi 0, %s45
    %s62 = sphi 0, %s46
    %s66 = sphi 0, %s66
    %s68 = sphi 0, %s66
    %s69 = sphi 0, %s68
    %s83 = sphi 0, %s69
    %s87 = sphi 0, %s87
    %s89 = sphi 0, %s87
    %s90 = sphi 0, %s89
    %s104 = sphi 0, %s90
    %s108 = sphi 0, %s108
    %s110 = sphi 0, %s108
    %s111 = sphi 0, %s110
    %s125 = sphi 0, %s111
    %s129 = sphi 0, %s129
    %s131 = sphi 0, %s129
    %s132 = sphi 0, %s131
    %s146 = sphi 0, %s132
    %s150 = sphi 0, %s150
    %s152 = sphi 0, %s150
    %s153 = sphi 0, %s152
    %s167 = sphi 0, %s153
    %s171 = sphi 0, %s171
    %s173 = sphi 0, %s171
    %s174 = sphi 0, %s173
    %s188 = sphi 0, %s174
    %s192 = sphi 0, %s192
    %s194 = sphi 0, %s192
    %s195 = sphi 0, %s194
    %s209 = sphi 0, %s195
    %s217 = sphi 0, %s219
    %s220 = sphi 0, %s217
    %s221 = sphi 0, %s220
    %s237 = sphi 0, %s221
    %s245 = sphi 0, %s247
    %s248 = sphi 0, %s245
    %s249 = sphi 0, %s248
    %s265 = sphi 0, %s249
  $region4: #{net_forward.1} parent=0 // loop_header_branch
    %21 = sbr.rel (%p19) target = $region8
  $region5: #{net_forward.1} parent=0 // loop_body
    %s23 = ssub.s32 %s18, 1
    %s24 = ssub.s32 %s18, 2
    %s31 = sadd.s32 1, %s26
    %p32 = scmp.ge.s32.totalorder %s31, 1
    %s33 = scalar_select %p32, 0, %s31
    %s34 = sadd.s32 1, %s25
    %s35 = scalar_select %p32, %s34, %s25
    %p36 = scmp.ge.s32.totalorder %s35, 2
    %s37 = scalar_select %p36, 0, %s35
    %s38 = ssub.s32 %s25, %s37
    %s39 = ssub.s32 %s26, %s33
    %s40 = sor.u32 %s38, %s39
    %p41 = scmp.eq.s32.totalorder %s40, 0
    %s43 = sadd.s32 %s42, 1
    %s44 = scalar_select %p41, %s42, %s43
    %p47 = pneg %p41
    %p48 = scmp.eq.s32.totalorder %s18, 1
    %p49 = por %p47, %p48
    %p50 = scmp.ne.s32.totalorder %s42, %s45
    %p51 = scmp.eq.s32.totalorder %s18, 0
    %p52 = por %p50, %p51
    %p53 = scmp.ne.s32.totalorder %s42, %s45
    %p54 = scmp.eq.s32.totalorder %s23, 1
    %p55 = por %p53, %p54
    %p56 = scmp.ne.s32.totalorder %s45, %s46
    %p57 = scmp.eq.s32.totalorder %s23, 0
    %p58 = por %p56, %p57
    %p59 = scmp.ne.s32.totalorder %s45, %s46
    %p60 = scmp.eq.s32.totalorder %s24, 1
    %p61 = por %p59, %p60
    %p63 = scmp.ne.s32.totalorder %s46, %s62
    %p64 = scmp.eq.s32.totalorder %s24, 0
    %p65 = por %p63, %p64
    %s67 = sadd.s32 %s66, 1
    %p70 = scmp.eq.s32.totalorder %s18, 1
    %p71 = scmp.ne.s32.totalorder %s66, %s68
    %p72 = scmp.eq.s32.totalorder %s18, 0
    %p73 = por %p71, %p72
    %p74 = scmp.ne.s32.totalorder %s66, %s68
    %p75 = scmp.eq.s32.totalorder %s23, 1
    %p76 = por %p74, %p75
    %p77 = scmp.ne.s32.totalorder %s68, %s69
    %p78 = scmp.eq.s32.totalorder %s23, 0
    %p79 = por %p77, %p78
    %p80 = scmp.ne.s32.totalorder %s68, %s69
    %p81 = scmp.eq.s32.totalorder %s24, 1
    %p82 = por %p80, %p81
    %p84 = scmp.ne.s32.totalorder %s69, %s83
    %p85 = scmp.eq.s32.totalorder %s24, 0
    %p86 = por %p84, %p85
    %s88 = sadd.s32 %s87, 1
    %p91 = scmp.eq.s32.totalorder %s18, 1
    %p92 = scmp.ne.s32.totalorder %s87, %s89
    %p93 = scmp.eq.s32.totalorder %s18, 0
    %p94 = por %p92, %p93
    %p95 = scmp.ne.s32.totalorder %s87, %s89
    %p96 = scmp.eq.s32.totalorder %s23, 1
    %p97 = por %p95, %p96
    %p98 = scmp.ne.s32.totalorder %s89, %s90
    %p99 = scmp.eq.s32.totalorder %s23, 0
    %p100 = por %p98, %p99
    %p101 = scmp.ne.s32.totalorder %s89, %s90
    %p102 = scmp.eq.s32.totalorder %s24, 1
    %p103 = por %p101, %p102
    %p105 = scmp.ne.s32.totalorder %s90, %s104
    %p106 = scmp.eq.s32.totalorder %s24, 0
    %p107 = por %p105, %p106
    %s109 = sadd.s32 %s108, 1
    %p112 = scmp.eq.s32.totalorder %s18, 1
    %p113 = scmp.ne.s32.totalorder %s108, %s110
    %p114 = scmp.eq.s32.totalorder %s18, 0
    %p115 = por %p113, %p114
    %p116 = scmp.ne.s32.totalorder %s108, %s110
    %p117 = scmp.eq.s32.totalorder %s23, 1
    %p118 = por %p116, %p117
    %p119 = scmp.ne.s32.totalorder %s110, %s111
    %p120 = scmp.eq.s32.totalorder %s23, 0
    %p121 = por %p119, %p120
    %p122 = scmp.ne.s32.totalorder %s110, %s111
    %p123 = scmp.eq.s32.totalorder %s24, 1
    %p124 = por %p122, %p123
    %p126 = scmp.ne.s32.totalorder %s111, %s125
    %p127 = scmp.eq.s32.totalorder %s24, 0
    %p128 = por %p126, %p127
    %s130 = sadd.s32 %s129, 1
    %p133 = scmp.eq.s32.totalorder %s18, 1
    %p134 = scmp.ne.s32.totalorder %s129, %s131
    %p135 = scmp.eq.s32.totalorder %s18, 0
    %p136 = por %p134, %p135
    %p137 = scmp.ne.s32.totalorder %s129, %s131
    %p138 = scmp.eq.s32.totalorder %s23, 1
    %p139 = por %p137, %p138
    %p140 = scmp.ne.s32.totalorder %s131, %s132
    %p141 = scmp.eq.s32.totalorder %s23, 0
    %p142 = por %p140, %p141
    %p143 = scmp.ne.s32.totalorder %s131, %s132
    %p144 = scmp.eq.s32.totalorder %s24, 1
    %p145 = por %p143, %p144
    %p147 = scmp.ne.s32.totalorder %s132, %s146
    %p148 = scmp.eq.s32.totalorder %s24, 0
    %p149 = por %p147, %p148
    %s151 = sadd.s32 %s150, 1
    %p154 = scmp.eq.s32.totalorder %s18, 1
    %p155 = scmp.ne.s32.totalorder %s150, %s152
    %p156 = scmp.eq.s32.totalorder %s18, 0
    %p157 = por %p155, %p156
    %p158 = scmp.ne.s32.totalorder %s150, %s152
    %p159 = scmp.eq.s32.totalorder %s23, 1
    %p160 = por %p158, %p159
    %p161 = scmp.ne.s32.totalorder %s152, %s153
    %p162 = scmp.eq.s32.totalorder %s23, 0
    %p163 = por %p161, %p162
    %p164 = scmp.ne.s32.totalorder %s152, %s153
    %p165 = scmp.eq.s32.totalorder %s24, 1
    %p166 = por %p164, %p165
    %p168 = scmp.ne.s32.totalorder %s153, %s167
    %p169 = scmp.eq.s32.totalorder %s24, 0
    %p170 = por %p168, %p169
    %s172 = sadd.s32 %s171, 1
    %p175 = scmp.eq.s32.totalorder %s18, 1
    %p176 = scmp.ne.s32.totalorder %s171, %s173
    %p177 = scmp.eq.s32.totalorder %s18, 0
    %p178 = por %p176, %p177
    %p179 = scmp.ne.s32.totalorder %s171, %s173
    %p180 = scmp.eq.s32.totalorder %s23, 1
    %p181 = por %p179, %p180
    %p182 = scmp.ne.s32.totalorder %s173, %s174
    %p183 = scmp.eq.s32.totalorder %s23, 0
    %p184 = por %p182, %p183
    %p185 = scmp.ne.s32.totalorder %s173, %s174
    %p186 = scmp.eq.s32.totalorder %s24, 1
    %p187 = por %p185, %p186
    %p189 = scmp.ne.s32.totalorder %s174, %s188
    %p190 = scmp.eq.s32.totalorder %s24, 0
    %p191 = por %p189, %p190
    %s193 = sadd.s32 %s192, 1
    %p196 = scmp.eq.s32.totalorder %s18, 1
    %p197 = scmp.ne.s32.totalorder %s192, %s194
    %p198 = scmp.eq.s32.totalorder %s18, 0
    %p199 = por %p197, %p198
    %p200 = scmp.ne.s32.totalorder %s192, %s194
    %p201 = scmp.eq.s32.totalorder %s23, 1
    %p202 = por %p200, %p201
    %p203 = scmp.ne.s32.totalorder %s194, %s195
    %p204 = scmp.eq.s32.totalorder %s23, 0
    %p205 = por %p203, %p204
    %p206 = scmp.ne.s32.totalorder %s194, %s195
    %p207 = scmp.eq.s32.totalorder %s24, 1
    %p208 = por %p206, %p207
    %p210 = scmp.ne.s32.totalorder %s195, %s209
    %p211 = scmp.eq.s32.totalorder %s24, 0
    %p212 = por %p210, %p211
    %s213 = ssub.s32 %s25, %s37
    %s214 = ssub.s32 %s26, %s33
    %s215 = sor.u32 %s213, %s214
    %p216 = scmp.eq.s32.totalorder %s215, 0
    %s218 = sadd.s32 %s217, 1
    %s219 = scalar_select %p216, %s217, %s218
    %p222 = pneg %p216
    %p223 = scmp.eq.s32.totalorder %s18, 1
    %p224 = por %p222, %p223
    %p225 = scmp.ne.s32.totalorder %s217, %s220
    %p226 = scmp.eq.s32.totalorder %s18, 0
    %p227 = por %p225, %p226
    %p228 = scmp.ne.s32.totalorder %s217, %s220
    %p229 = scmp.eq.s32.totalorder %s23, 1
    %p230 = por %p228, %p229
    %p231 = scmp.ne.s32.totalorder %s220, %s221
    %p232 = scmp.eq.s32.totalorder %s23, 0
    %p233 = por %p231, %p232
    %p234 = scmp.ne.s32.totalorder %s220, %s221
    %p235 = scmp.eq.s32.totalorder %s24, 1
    %p236 = por %p234, %p235
    %p238 = scmp.ne.s32.totalorder %s221, %s237
    %p239 = scmp.eq.s32.totalorder %s24, 0
    %p240 = por %p238, %p239
    %s241 = ssub.s32 %s25, %s37
    %s242 = ssub.s32 %s26, %s33
    %s243 = sor.u32 %s241, %s242
    %p244 = scmp.eq.s32.totalorder %s243, 0
    %s246 = sadd.s32 %s245, 1
    %s247 = scalar_select %p244, %s245, %s246
    %p250 = pneg %p244
    %p251 = scmp.eq.s32.totalorder %s18, 1
    %p252 = por %p250, %p251
    %p253 = scmp.ne.s32.totalorder %s245, %s248
    %p254 = scmp.eq.s32.totalorder %s18, 0
    %p255 = por %p253, %p254
    %p256 = scmp.ne.s32.totalorder %s245, %s248
    %p257 = scmp.eq.s32.totalorder %s23, 1
    %p258 = por %p256, %p257
    %p259 = scmp.ne.s32.totalorder %s248, %s249
    %p260 = scmp.eq.s32.totalorder %s23, 0
    %p261 = por %p259, %p260
    %p262 = scmp.ne.s32.totalorder %s248, %s249
    %p263 = scmp.eq.s32.totalorder %s24, 1
    %p264 = por %p262, %p263
    %p266 = scmp.ne.s32.totalorder %s249, %s265
    %p267 = scmp.eq.s32.totalorder %s24, 0
    %p268 = por %p266, %p267
    %p269 = scmp.le.s32.totalorder 1, %s18
    %p270 = scmp.lt.s32.totalorder %s18, 3
    %p271 = pnand %p269, %p270
    %p272 = pneg %p271
    // Predicated region
    $region9: #{net_forward.1} parent=5 // pred_check
      _
    $region10: #{net_forward.1} parent=5 // pred_check_branch
      %274 = sbr.rel (%p271) target = $region12
    $region11: #{net_forward.1} parent=5 // pred_region
      %s275 = ssub.s32 %s18, 1
      // Predicated region
      $region13: #{net_forward.1} parent=11 // pred_check
        %p276 = pneg %p79
      $region14: #{net_forward.1} parent=11 // pred_check_branch
        %278 = sbr.rel (%p276) target = $region16
      $region15: #{net_forward.1} parent=11 // pred_region
        _
      $region16: #{net_forward.1} parent=11 // pred_fallthru
        _
      // Predicated region
      $region17: #{net_forward.1} parent=11 // pred_check
        %p279 = pneg %p100
      $region18: #{net_forward.1} parent=11 // pred_check_branch
        %281 = sbr.rel (%p279) target = $region20
      $region19: #{net_forward.1} parent=11 // pred_region
        _
      $region20: #{net_forward.1} parent=11 // pred_fallthru
        _
      // Predicated region
      $region21: #{net_forward.1} parent=11 // pred_check
        %p282 = pneg %p121
      $region22: #{net_forward.1} parent=11 // pred_check_branch
        %284 = sbr.rel (%p282) target = $region24
      $region23: #{net_forward.1} parent=11 // pred_region
        _
      $region24: #{net_forward.1} parent=11 // pred_fallthru
        _
      // Predicated region
      $region25: #{net_forward.1} parent=11 // pred_check
        %p285 = pneg %p142
      $region26: #{net_forward.1} parent=11 // pred_check_branch
        %287 = sbr.rel (%p285) target = $region28
      $region27: #{net_forward.1} parent=11 // pred_region
        _
      $region28: #{net_forward.1} parent=11 // pred_fallthru
        _
      // Predicated region
      $region29: #{net_forward.1} parent=11 // pred_check
        %p288 = pneg %p163
      $region30: #{net_forward.1} parent=11 // pred_check_branch
        %290 = sbr.rel (%p288) target = $region32
      $region31: #{net_forward.1} parent=11 // pred_region
        _
      $region32: #{net_forward.1} parent=11 // pred_fallthru
        _
      // Predicated region
      $region33: #{net_forward.1} parent=11 // pred_check
        %p291 = pneg %p184
      $region34: #{net_forward.1} parent=11 // pred_check_branch
        %293 = sbr.rel (%p291) target = $region36
      $region35: #{net_forward.1} parent=11 // pred_region
        _
      $region36: #{net_forward.1} parent=11 // pred_fallthru
        _
      // Predicated region
      $region37: #{net_forward.1} parent=11 // pred_check
        %p294 = pneg %p205
      $region38: #{net_forward.1} parent=11 // pred_check_branch
        %296 = sbr.rel (%p294) target = $region40
      $region39: #{net_forward.1} parent=11 // pred_region
        _
      $region40: #{net_forward.1} parent=11 // pred_fallthru
        _
    $region12: #{net_forward.1} parent=5 // pred_fallthru
      _
    %p297 = scmp.lt.s32.totalorder %s18, 2
    // Predicated region
    $region41: #{net_forward.1} parent=5 // pred_check
      %p298 = pneg %p297
    $region42: #{net_forward.1} parent=5 // pred_check_branch
      %300 = sbr.rel (%p298) target = $region44
    $region43: #{net_forward.1} parent=5 // pred_region
      // Predicated region
      $region45: #{net_forward.1} parent=43 // pred_check
        %p301 = pneg %p52
      $region46: #{net_forward.1} parent=43 // pred_check_branch
        %303 = sbr.rel (%p301) target = $region48
      $region47: #{net_forward.1} parent=43 // pred_region
        %s304 = smul.u32 2, %s26
        %p305 = scmp.lt.s32.totalorder %s25, 1
        %s306 = scalar_select %p305, %s25, 1
        %p307 = scmp.lt.s32.totalorder %s304, 1
        %s308 = scalar_select %p307, %s304, 1
        %s309 = smul.addr %s306, 2
        %s310 = sadd.s32 %s308, %s309
        %s311 = smul.addr %s310, 4
        %s312 = scalar_lea.vmem %s0, %s311
        %s313 = smul.u32 2, %s26
      $region48: #{net_forward.1} parent=43 // pred_fallthru
        _
    $region44: #{net_forward.1} parent=5 // pred_fallthru
      _
    %p314 = scmp.le.s32.totalorder 1, %s18
    %p315 = scmp.lt.s32.totalorder %s18, 3
    %p316 = pnand %p314, %p315
    %p317 = pneg %p316
    // Predicated region
    $region49: #{net_forward.1} parent=5 // pred_check
      _
    $region50: #{net_forward.1} parent=5 // pred_check_branch
      %319 = sbr.rel (%p316) target = $region52
    $region51: #{net_forward.1} parent=5 // pred_region
      %s320 = ssub.s32 %s18, 1
      %s321 = smul.u32 2, %s28
      %p322 = scmp.lt.s32.totalorder %s27, 1
      %s323 = scalar_select %p322, %s27, 1
      %p324 = scmp.lt.s32.totalorder %s321, 1
      %s325 = scalar_select %p324, %s321, 1
      %s326 = smul.addr %s323, 2
      %s327 = sadd.s32 %s325, %s326
      %s328 = smul.addr %s327, 4
      %s329 = scalar_lea.vmem %s0, %s328
      %p330 = pneg %p58
      %p331 = pneg %p55
      %p332 = pneg %p79
      %p333 = pneg %p76
      %p334 = pneg %p100
      %p335 = pneg %p97
      %p336 = pneg %p121
      %p337 = pneg %p118
      %p338 = pneg %p142
      %p339 = pneg %p139
      %p340 = pneg %p163
      %p341 = pneg %p160
      %p342 = pneg %p184
      %p343 = pneg %p181
      %p344 = pneg %p205
      %p345 = pneg %p202
      %p346 = pneg %p233
      %p347 = pneg %p230
      %s348 = smul.u32 2, %s28
      %p349 = scmp.lt.s32.totalorder %s27, 1
      %s350 = scalar_select %p349, %s27, 1
      %p351 = scmp.lt.s32.totalorder %s348, 1
      %s352 = scalar_select %p351, %s348, 1
      %s353 = smul.addr %s350, 2
      %s354 = sadd.s32 %s352, %s353
      %s355 = smul.addr %s354, 4
      %s356 = scalar_lea.vmem %s8, %s355
      %p357 = pneg %p261
      %p358 = pneg %p258
      %s359 = smul.u32 2, %s28
      %p360 = scmp.lt.s32.totalorder %s27, 1
      %s361 = scalar_select %p360, %s27, 1
      %p362 = scmp.lt.s32.totalorder %s359, 1
      %s363 = scalar_select %p362, %s359, 1
      %s364 = smul.addr %s361, 2
      %s365 = sadd.s32 %s363, %s364
      %s366 = scalar_lea.vmem %s9, %s365
      %s367 = smul.u32 2, %s28
      %p368 = scmp.lt.s32.totalorder %s27, 1
      %s369 = scalar_select %p368, %s27, 1
      %p370 = scmp.lt.s32.totalorder %s367, 1
      %s371 = scalar_select %p370, %s367, 1
      %s372 = smul.addr %s369, 2
      %s373 = sadd.s32 %s371, %s372
      %s374 = smul.addr %s373, 4
      %s375 = scalar_lea.vmem %s0, %s374
      %s376 = smul.u32 2, %s28
      %s377 = smul.u32 2, %s28
      %p378 = scmp.lt.s32.totalorder %s27, 1
      %s379 = scalar_select %p378, %s27, 1
      %p380 = scmp.lt.s32.totalorder %s377, 1
      %s381 = scalar_select %p380, %s377, 1
      %s382 = smul.addr %s379, 2
      %s383 = sadd.s32 %s381, %s382
      %s384 = smul.addr %s383, 4
      %s385 = scalar_lea.vmem %s8, %s384
      %s386 = smul.u32 2, %s28
      %s387 = smul.u32 2, %s28
      %p388 = scmp.lt.s32.totalorder %s27, 1
      %s389 = scalar_select %p388, %s27, 1
      %p390 = scmp.lt.s32.totalorder %s387, 1
      %s391 = scalar_select %p390, %s387, 1
      %s392 = smul.addr %s389, 2
      %s393 = sadd.s32 %s391, %s392
      %s394 = scalar_lea.vmem %s9, %s393
      %s395 = smul.u32 2, %s28
      %v397 = vld [vmem:[%s375] sm:$0x77]
      %v398 = vld [vmem:[%s1] sm:$0xf]
      %v399 = vld [vmem:[%s1 + $0x4] sm:$0xf]
      %v400 = vld [vmem:[%s1 + $0x8] sm:$0xf]
      %v401 = vld [vmem:[%s1 + $0xc] sm:$0xf]
      %v402 = vld [vmem:[%s1 + $0x10] sm:$0xf]
      %v403 = vld [vmem:[%s1 + $0x14] sm:$0xf]
      %v404 = vld [vmem:[%s1 + $0x18] sm:$0xf]
      %v405 = vld [vmem:[%s1 + $0x1c] sm:$0xf]
      %v407 = vcombine.high %v397, %v397
      %v409 = vpack.c.bf16 %v397, %v397
      %v410 = vpack.c.bf16 %v407, %v407
      %v411 = vld [vmem:[%s2] sm:$0xff]
      %v412 = vld [vmem:[%s2 + $0x8] sm:$0xff]
      %v413 = vld [vmem:[%s2 + $0x10] sm:$0xff]
      %v414 = vld [vmem:[%s2 + $0x18] sm:$0xff]
      %v415 = vld [vmem:[%s2 + $0x20] sm:$0xff]
      %v416 = vld [vmem:[%s2 + $0x28] sm:$0xff]
      %v417 = vld [vmem:[%s2 + $0x30] sm:$0xff]
      %v418 = vld [vmem:[%s2 + $0x38] sm:$0xff]
      %420 = vset.pattern.permute.xlu0 0
      %421 = vperm.xlu0 %420, %v411
      %v422 = vpop.permute.xlu0 %421
      %425 = vset.pattern.permute.xlu0 0
      %426 = vperm.xlu0 %425, %v412
      %v427 = vpop.permute.xlu0 %426
      %430 = vset.pattern.permute.xlu0 0
      %431 = vperm.xlu0 %430, %v413
      %v432 = vpop.permute.xlu0 %431
      %435 = vset.pattern.permute.xlu0 0
      %436 = vperm.xlu0 %435, %v414
      %v437 = vpop.permute.xlu0 %436
      %440 = vset.pattern.permute.xlu0 0
      %441 = vperm.xlu0 %440, %v415
      %v442 = vpop.permute.xlu0 %441
      %445 = vset.pattern.permute.xlu0 0
      %446 = vperm.xlu0 %445, %v416
      %v447 = vpop.permute.xlu0 %446
      %450 = vset.pattern.permute.xlu0 0
      %451 = vperm.xlu0 %450, %v417
      %v452 = vpop.permute.xlu0 %451
      %455 = vset.pattern.permute.xlu0 0
      %456 = vperm.xlu0 %455, %v418
      %v457 = vpop.permute.xlu0 %456
      %v467 = vunpack.c.l.b16 %v398
      %v468 = vunpack.c.l.b16 %v399
      %v469 = vunpack.c.l.b16 %v400
      %v470 = vunpack.c.l.b16 %v401
      %v471 = vunpack.c.l.b16 %v402
      %v472 = vunpack.c.l.b16 %v403
      %v473 = vunpack.c.l.b16 %v404
      %v474 = vunpack.c.l.b16 %v405
      %v475 = vpack.c.b16 %v468, %v467
      %v476 = vpack.c.b16 %v470, %v469
      %v477 = vpack.c.b16 %v472, %v471
      %v478 = vpack.c.b16 %v474, %v473
      %vm479 = vcmask 23552
      %v481 = vsel %vm479, %v475, 0
      %v484 = vsel %vm479, %v476, 0
      %v487 = vsel %vm479, %v477, 0
      %v490 = vsel %vm479, %v478, 0
      %vm492 = vcmask 1040384
      %vm493 = vcmask 1041408
      %v494 = vsel %vm492, 4294967295, 65535
      %v495 = vsel %vm493, %v494, 0
      %v497 = vand.u32 %v409, %v495
      %v500 = vand.u32 %v410, %v495
      %502 = vmatprep.subr.bf16.mxu0 %v500
      %503 = vmatpush1.bf16.msra.mxu0 %v497
      %504 = vmatprep.subr.bf16.mxu0 0
      %505 = vmatpush1.bf16.msra.mxu0 0
      %506 = vmatprep.subr.bf16.mxu0 0
      %507 = vmatpush1.bf16.msra.mxu0 0
      %508 = vmatprep.subr.bf16.mxu0 0
      %509 = vmatpush1.bf16.msra.mxu0 0
      %510 = vmatprep.subr.bf16.mxu0 0
      %511 = vmatpush1.bf16.msra.mxu0 0
      %512 = vmatprep.subr.bf16.mxu0 0
      %513 = vmatpush1.bf16.msra.mxu0 0
      %514 = vmatprep.subr.bf16.mxu0 0
      %515 = vmatpush1.bf16.msra.mxu0 0
      %516 = vmatprep.subr.bf16.mxu0 0
      %517 = vmatpush1.bf16.msra.mxu0 0
      %518 = vmatprep.subr.bf16.mxu0 0
      %519 = vmatpush1.bf16.msra.mxu0 0
      %520 = vmatprep.subr.bf16.mxu0 0
      %521 = vmatpush1.bf16.msra.mxu0 0
      %522 = vmatprep.subr.bf16.mxu0 0
      %523 = vmatpush1.bf16.msra.mxu0 0
      %524 = vmatprep.subr.bf16.mxu0 0
      %525 = vmatpush1.bf16.msra.mxu0 0
      %526 = vmatprep.subr.bf16.mxu0 0
      %527 = vmatpush1.bf16.msra.mxu0 0
      %528 = vmatprep.subr.bf16.mxu0 0
      %529 = vmatpush1.bf16.msra.mxu0 0
      %530 = vmatprep.subr.bf16.mxu0 0
      %531 = vmatpush1.bf16.msra.mxu0 0
      %532 = vmatprep.subr.bf16.mxu0 0
      %533 = vmatpush1.bf16.msra.mxu0 0
      %534 = vmatprep.mubr.bf16.mxu0 0
      %535 = vmatmul.mubr.bf16.gmra.mrb[0].mxu0 %v481
      %v536 = vpop.f32.mrb[0].mxu0
      %v537 = vadd.f32 %v422, %v536
      %v538 = vpop.f32.mrb[0].mxu0
      %v539 = vadd.f32 %v422, %v538
      %v540 = vpop.f32.mrb[0].mxu0
      %v541 = vadd.f32 %v427, %v540
      %v542 = vpop.f32.mrb[0].mxu0
      %v543 = vadd.f32 %v427, %v542
      %544 = vmatprep.mubr.bf16.mxu0 0
      %545 = vmatmul.mubr.bf16.gmra.mrb[0].mxu0 %v484
      %v546 = vpop.f32.mrb[0].mxu0
      %v547 = vadd.f32 %v432, %v546
      %v548 = vpop.f32.mrb[0].mxu0
      %v549 = vadd.f32 %v432, %v548
      %v550 = vpop.f32.mrb[0].mxu0
      %v551 = vadd.f32 %v437, %v550
      %v552 = vpop.f32.mrb[0].mxu0
      %v553 = vadd.f32 %v437, %v552
      %554 = vmatprep.mubr.bf16.mxu0 0
      %555 = vmatmul.mubr.bf16.gmra.mrb[0].mxu0 %v487
      %v556 = vpop.f32.mrb[0].mxu0
      %v557 = vadd.f32 %v442, %v556
      %v558 = vpop.f32.mrb[0].mxu0
      %v559 = vadd.f32 %v442, %v558
      %v560 = vpop.f32.mrb[0].mxu0
      %v561 = vadd.f32 %v447, %v560
      %v562 = vpop.f32.mrb[0].mxu0
      %v563 = vadd.f32 %v447, %v562
      %564 = vmatprep.mubr.bf16.mxu0 0
      %565 = vmatmul.mubr.bf16.gmra.mrb[0].mxu0 %v490
      %v566 = vpop.f32.mrb[0].mxu0
      %v567 = vadd.f32 %v452, %v566
      %v568 = vpop.f32.mrb[0].mxu0
      %v569 = vadd.f32 %v452, %v568
      %v570 = vpop.f32.mrb[0].mxu0
      %v571 = vadd.f32 %v457, %v570
      %v572 = vpop.f32.mrb[0].mxu0
      %v573 = vadd.f32 %v457, %v572
      %574 = vdwg.mxu0
      %v575 = vmax.f32 %v537, 0.0
      %v576 = vmax.f32 %v539, 0.0
      %v577 = vmax.f32 %v541, 0.0
      %v578 = vmax.f32 %v543, 0.0
      %v579 = vmax.f32 %v547, 0.0
      %v580 = vmax.f32 %v549, 0.0
      %v581 = vmax.f32 %v551, 0.0
      %v582 = vmax.f32 %v553, 0.0
      %v583 = vld [vmem:[%s3] sm:$0x3]
      %v584 = vpack.c.bf16 %v577, %v575
      %v585 = vpack.c.bf16 %v578, %v576
      %v586 = vpack.c.bf16 %v581, %v579
      %v587 = vpack.c.bf16 %v582, %v580
      %v588 = vld [vmem:[%s4] sm:$0x7]
      %590 = vset.pattern.permute.xlu0 0
      %591 = vperm.xlu0 %590, %v588
      %v592 = vpop.permute.xlu0 %591
      %vm594 = vcmask 261120
      %v596 = vsel %vm594, %v583, 0
      %598 = vmatprep.subr.bf16.mxu0 %v585
      %599 = vmatpush1.bf16.msra.mxu0 %v584
      %600 = vmatprep.subr.bf16.mxu0 %v587
      %601 = vmatpush1.bf16.msra.mxu0 %v586
      %602 = vmatprep.subr.bf16.mxu0 0
      %603 = vmatpush1.bf16.msra.mxu0 0
      %604 = vmatprep.subr.bf16.mxu0 0
      %605 = vmatpush1.bf16.msra.mxu0 0
      %606 = vmatprep.subr.bf16.mxu0 0
      %607 = vmatpush1.bf16.msra.mxu0 0
      %608 = vmatprep.subr.bf16.mxu0 0
      %609 = vmatpush1.bf16.msra.mxu0 0
      %610 = vmatprep.subr.bf16.mxu0 0
      %611 = vmatpush1.bf16.msra.mxu0 0
      %612 = vmatprep.subr.bf16.mxu0 0
      %613 = vmatpush1.bf16.msra.mxu0 0
      %614 = vmatprep.subr.bf16.mxu0 0
      %615 = vmatpush1.bf16.msra.mxu0 0
      %616 = vmatprep.subr.bf16.mxu0 0
      %617 = vmatpush1.bf16.msra.mxu0 0
      %618 = vmatprep.subr.bf16.mxu0 0
      %619 = vmatpush1.bf16.msra.mxu0 0
      %620 = vmatprep.subr.bf16.mxu0 0
      %621 = vmatpush1.bf16.msra.mxu0 0
      %622 = vmatprep.subr.bf16.mxu0 0
      %623 = vmatpush1.bf16.msra.mxu0 0
      %624 = vmatprep.subr.bf16.mxu0 0
      %625 = vmatpush1.bf16.msra.mxu0 0
      %626 = vmatprep.subr.bf16.mxu0 0
      %627 = vmatpush1.bf16.msra.mxu0 0
      %628 = vmatprep.subr.bf16.mxu0 0
      %629 = vmatpush1.bf16.msra.mxu0 0
      %630 = vmatprep.mubr.bf16.mxu0 0
      %631 = vmatmul.mubr.bf16.gmra.mrb[0].mxu0 %v596
      %v632 = vpop.f32.mrb[0].mxu0
      %v633 = vadd.f32 %v592, %v632
      %v634 = vpop.f32.mrb[0].mxu0
      %v635 = vadd.f32 %v592, %v634
      %v636 = vpop.f32.mrb[0].mxu0
      %v637 = vpop.f32.mrb[0].mxu0
      %638 = vdwg.mxu0
      %vm639 = vcmask 1042432
      %v640 = vsel %vm639, %v633, -inf
      %v641 = vrot.slane %v640, 4
      %v642 = vmax.f32 %v640, %v641
      %v643 = vrot.slane %v642, 2
      %v644 = vmax.f32 %v642, %v643
      %v645 = vrot.slane %v644, 1
      %v646 = vmax.f32 %v644, %v645
      %v647 = vsel %vm639, %v635, -inf
      %v648 = vrot.slane %v647, 4
      %v649 = vmax.f32 %v647, %v648
      %v650 = vrot.slane %v649, 2
      %v651 = vmax.f32 %v649, %v650
      %v652 = vrot.slane %v651, 1
      %v653 = vmax.f32 %v651, %v652
      %v654 = vsub.f32 %v633, %v646
      %v655 = vsub.f32 %v635, %v653
      %v656 = vmul.f32 %v654, 1.442695
      %v657 = vpow.pop %v656
      %v658 = vmul.f32 %v655, 1.442695
      %v659 = vpow.pop %v658
      %v660 = vsel %vm639, %v657, 0.0
      %v661 = vrot.slane %v660, 4
      %v662 = vadd.f32 %v660, %v661
      %v663 = vrot.slane %v662, 2
      %v664 = vadd.f32 %v662, %v663
      %v665 = vrot.slane %v664, 1
      %v666 = vadd.f32 %v664, %v665
      %v667 = vsel %vm639, %v659, 0.0
      %v668 = vrot.slane %v667, 4
      %v669 = vadd.f32 %v667, %v668
      %v670 = vrot.slane %v669, 2
      %v671 = vadd.f32 %v669, %v670
      %v672 = vrot.slane %v671, 1
      %v673 = vadd.f32 %v671, %v672
      %v674 = vrcp.pop %v666
      %v675 = vmul.f32 %v657, %v674
      %v676 = vrcp.pop %v673
      %v677 = vmul.f32 %v659, %v676
      %v678 = vld [vmem:[%s5] sm:$0xf]
      %v679 = vld [vmem:[%s5 + $0x4] sm:$0xf]
      %v680 = vld [vmem:[%s5 + $0x8] sm:$0xf]
      %v681 = vld [vmem:[%s5 + $0xc] sm:$0xf]
      %v682 = vpack.c.bf16 %v675, %v675
      %v683 = vpack.c.bf16 %v677, %v677
      %v688 = vunpack.c.l.b16 %v678
      %v689 = vunpack.c.l.b16 %v679
      %v690 = vunpack.c.l.b16 %v680
      %v691 = vunpack.c.l.b16 %v681
      %v692 = vpack.c.b16 %v689, %v688
      %v693 = vpack.c.b16 %v691, %v690
      %v695 = vsel %vm479, %v692, 0
      %v698 = vsel %vm479, %v693, 0
      %v701 = vand.u32 %v682, %v495
      %v704 = vand.u32 %v683, %v495
      %706 = vmatprep.subr.bf16.mxu0 %v704
      %707 = vmatpush1.bf16.msra.mxu0 %v701
      %708 = vmatprep.subr.bf16.mxu0 0
      %709 = vmatpush1.bf16.msra.mxu0 0
      %710 = vmatprep.subr.bf16.mxu0 0
      %711 = vmatpush1.bf16.msra.mxu0 0
      %712 = vmatprep.subr.bf16.mxu0 0
      %713 = vmatpush1.bf16.msra.mxu0 0
      %714 = vmatprep.subr.bf16.mxu0 0
      %715 = vmatpush1.bf16.msra.mxu0 0
      %716 = vmatprep.subr.bf16.mxu0 0
      %717 = vmatpush1.bf16.msra.mxu0 0
      %718 = vmatprep.subr.bf16.mxu0 0
      %719 = vmatpush1.bf16.msra.mxu0 0
      %720 = vmatprep.subr.bf16.mxu0 0
      %721 = vmatpush1.bf16.msra.mxu0 0
      %722 = vmatprep.subr.bf16.mxu0 0
      %723 = vmatpush1.bf16.msra.mxu0 0
      %724 = vmatprep.subr.bf16.mxu0 0
      %725 = vmatpush1.bf16.msra.mxu0 0
      %726 = vmatprep.subr.bf16.mxu0 0
      %727 = vmatpush1.bf16.msra.mxu0 0
      %728 = vmatprep.subr.bf16.mxu0 0
      %729 = vmatpush1.bf16.msra.mxu0 0
      %730 = vmatprep.subr.bf16.mxu0 0
      %731 = vmatpush1.bf16.msra.mxu0 0
      %732 = vmatprep.subr.bf16.mxu0 0
      %733 = vmatpush1.bf16.msra.mxu0 0
      %734 = vmatprep.subr.bf16.mxu0 0
      %735 = vmatpush1.bf16.msra.mxu0 0
      %736 = vmatprep.subr.bf16.mxu0 0
      %737 = vmatpush1.bf16.msra.mxu0 0
      %738 = vmatprep.mubr.bf16.mxu0 0
      %739 = vmatmul.mubr.bf16.gmra.mrb[0].mxu0 %v695
      %v740 = vpop.f32.mrb[0].mxu0
      %v741 = vadd.f32 0.0, %v740
      %v742 = vpop.f32.mrb[0].mxu0
      %v743 = vadd.f32 0.0, %v742
      %v744 = vpop.f32.mrb[0].mxu0
      %v745 = vadd.f32 0.0, %v744
      %v746 = vpop.f32.mrb[0].mxu0
      %v747 = vadd.f32 0.0, %v746
      %748 = vmatprep.mubr.bf16.mxu0 0
      %749 = vmatmul.mubr.bf16.gmra.mrb[0].mxu0 %v698
      %v750 = vpop.f32.mrb[0].mxu0
      %v751 = vadd.f32 0.0, %v750
      %v752 = vpop.f32.mrb[0].mxu0
      %v753 = vadd.f32 0.0, %v752
      %v754 = vpop.f32.mrb[0].mxu0
      %v755 = vadd.f32 0.0, %v754
      %v756 = vpop.f32.mrb[0].mxu0
      %v757 = vadd.f32 0.0, %v756
      %758 = vdwg.mxu0
      %v759 = vadd.f32 %v557, %v741
      %v760 = vadd.f32 %v559, %v743
      %v761 = vadd.f32 %v561, %v745
      %v762 = vadd.f32 %v563, %v747
      %v763 = vadd.f32 %v567, %v751
      %v764 = vadd.f32 %v569, %v753
      %v765 = vadd.f32 %v571, %v755
      %v766 = vadd.f32 %v573, %v757
      %v767 = vmax.f32 %v759, 0.0
      %v768 = vmax.f32 %v760, 0.0
      %v769 = vmax.f32 %v761, 0.0
      %v770 = vmax.f32 %v762, 0.0
      %v771 = vmax.f32 %v763, 0.0
      %v772 = vmax.f32 %v764, 0.0
      %v773 = vmax.f32 %v765, 0.0
      %v774 = vmax.f32 %v766, 0.0
      %v775 = vld [vmem:[%s6] sm:$0xff]
      %v776 = vld [vmem:[%s6 + $0x8] sm:$0xff]
      %v777 = vld [vmem:[%s6 + $0x10] sm:$0xff]
      %v778 = vld [vmem:[%s6 + $0x18] sm:$0xff]
      %780 = vset.pattern.permute.xlu0 0
      %781 = vperm.xlu0 %780, %v775
      %v782 = vpop.permute.xlu0 %781
      %785 = vset.pattern.permute.xlu0 0
      %786 = vperm.xlu0 %785, %v776
      %v787 = vpop.permute.xlu0 %786
      %790 = vset.pattern.permute.xlu0 0
      %791 = vperm.xlu0 %790, %v777
      %v792 = vpop.permute.xlu0 %791
      %795 = vset.pattern.permute.xlu0 0
      %796 = vperm.xlu0 %795, %v778
      %v797 = vpop.permute.xlu0 %796
      %v799 = vmul.f32 %v782, %v767
      %v800 = vmul.f32 %v782, %v768
      %v801 = vmul.f32 %v787, %v769
      %v802 = vmul.f32 %v787, %v770
      %v803 = vmul.f32 %v792, %v771
      %v804 = vmul.f32 %v792, %v772
      %v805 = vmul.f32 %v797, %v773
      %v806 = vmul.f32 %v797, %v774
      %v807 = vadd.f32 %v799, %v801
      %v808 = vadd.f32 %v807, %v803
      %v809 = vadd.f32 %v808, %v805
      %v810 = vrot.slane %v809, 4
      %v811 = vadd.f32 %v809, %v810
      %v812 = vrot.slane %v811, 2
      %v813 = vadd.f32 %v811, %v812
      %v814 = vrot.slane %v813, 1
      %v815 = vadd.f32 %v813, %v814
      %v816 = vadd.f32 %v800, %v802
      %v817 = vadd.f32 %v816, %v804
      %v818 = vadd.f32 %v817, %v806
      %v819 = vrot.slane %v818, 4
      %v820 = vadd.f32 %v818, %v819
      %v821 = vrot.slane %v820, 2
      %v822 = vadd.f32 %v820, %v821
      %v823 = vrot.slane %v822, 1
      %v824 = vadd.f32 %v822, %v823
      %v825 = vld [vmem:[#allocation2] sm:$0x1]
      %827 = vset.pattern.permute.xlu0 0
      %828 = vperm.xlu0 %827, %v825
      %v829 = vpop.permute.xlu0 %828
      %v831 = vlaneseq
      %v832 = vshrl.u32 %v831, 7
      %v833 = vsub.s32 0, %v832
      %v834 = vrot.slane %v829, %v833
      %v835 = vadd.f32 %v815, %v834
      %v836 = vadd.f32 %v824, %v834
      %v837 = vmul.f32 %v675, %v835
      %v838 = vmul.f32 %v677, %v836
      %v841 = vrot.slane %v837, 1
      %v842 = vrot.slane %v838, 1
      %v845 = vadd.f32 %v675, %v841
      %v846 = vadd.f32 %v677, %v842
      %v849 = vcombine.low %v633, %v635
      %851 = vst [vmem:[%s385] sm:$0x77] %v849
      %v854 = vcombine.low %v845, %v846
      %v856 = vunpack.c.l.s4 1966171168
      %v857 = vunpack.c.0.s8 %v856
      %v858 = vlaneseq
      %v859 = vshrl.u32 %v858, 7
      %v860 = vsub.s32 %v857, %v859
      %v861 = vrot.slane %v854, %v860
      %v862 = vcombine.high %v861, %v861
      %v864 = vunpack.c.l.s4 1966171168
      %v865 = vunpack.c.0.s8 %v864
      %v866 = vlaneseq
      %v867 = vshrl.u32 %v866, 7
      %v868 = vsub.s32 %v865, %v867
      %v869 = vrot.slane %v862, %v868
      %v871 = vlaneseq
      %vm872 = vcmp.ge.s32.totalorder %v871, 0
      %vm873 = vcmp.lt.s32.totalorder %v871, 256
      %vm874 = vmand %vm872, %vm873
      %875 = vst.msk [vmem:[%s394] sm:$0x3] %vm874, %v869
      %s876 = smul.u32 2, %s28
      %p877 = scmp.lt.s32.totalorder %s27, 1
      %s878 = scalar_select %p877, %s27, 1
      %p879 = scmp.lt.s32.totalorder %s876, 1
      %s880 = scalar_select %p879, %s876, 1
      %s881 = smul.addr %s878, 2
      %s882 = sadd.s32 %s880, %s881
      %s883 = smul.addr %s882, 4
      %s884 = scalar_lea.vmem %s8, %s883
      %s885 = smul.u32 2, %s28
      %p886 = scmp.lt.s32.totalorder %s27, 1
      %s887 = scalar_select %p886, %s27, 1
      %p888 = scmp.lt.s32.totalorder %s885, 1
      %s889 = scalar_select %p888, %s885, 1
      %s890 = smul.addr %s887, 2
      %s891 = sadd.s32 %s889, %s890
      %s892 = scalar_lea.vmem %s9, %s891
      // Predicated region
      $region53: #{net_forward.1} parent=51 // pred_check
        %p893 = pneg %p230
      $region54: #{net_forward.1} parent=51 // pred_check_branch
        %895 = sbr.rel (%p893) target = $region56
      $region55: #{net_forward.1} parent=51 // pred_region
        %s896 = smul.u32 2, %s28
      $region56: #{net_forward.1} parent=51 // pred_fallthru
        _
      // Predicated region
      $region57: #{net_forward.1} parent=51 // pred_check
        %p897 = pneg %p258
      $region58: #{net_forward.1} parent=51 // pred_check_branch
        %899 = sbr.rel (%p897) target = $region60
      $region59: #{net_forward.1} parent=51 // pred_region
        %s900 = smul.u32 2, %s28
      $region60: #{net_forward.1} parent=51 // pred_fallthru
        _
    $region52: #{net_forward.1} parent=5 // pred_fallthru
      _
    %p901 = scmp.le.s32.totalorder 2, %s18
    // Predicated region
    $region61: #{net_forward.1} parent=5 // pred_check
      %p902 = pneg %p901
    $region62: #{net_forward.1} parent=5 // pred_check_branch
      %904 = sbr.rel (%p902) target = $region64
    $region63: #{net_forward.1} parent=5 // pred_region
      %s905 = ssub.s32 %s18, 2
      // Predicated region
      $region65: #{net_forward.1} parent=63 // pred_check
        %p906 = pneg %p236
      $region66: #{net_forward.1} parent=63 // pred_check_branch
        %908 = sbr.rel (%p906) target = $region68
      $region67: #{net_forward.1} parent=63 // pred_region
        %s909 = smul.u32 2, %s30
        %p910 = scmp.lt.s32.totalorder %s29, 1
        %s911 = scalar_select %p910, %s29, 1
        %p912 = scmp.lt.s32.totalorder %s909, 1
        %s913 = scalar_select %p912, %s909, 1
        %s914 = smul.addr %s911, 2
        %s915 = sadd.s32 %s913, %s914
        %s916 = smul.addr %s915, 4
        %s917 = scalar_lea.vmem %s8, %s916
      $region68: #{net_forward.1} parent=63 // pred_fallthru
        _
      // Predicated region
      $region69: #{net_forward.1} parent=63 // pred_check
        %p918 = pneg %p264
      $region70: #{net_forward.1} parent=63 // pred_check_branch
        %920 = sbr.rel (%p918) target = $region72
      $region71: #{net_forward.1} parent=63 // pred_region
        %s921 = smul.u32 2, %s30
        %p922 = scmp.lt.s32.totalorder %s29, 1
        %s923 = scalar_select %p922, %s29, 1
        %p924 = scmp.lt.s32.totalorder %s921, 1
        %s925 = scalar_select %p924, %s921, 1
        %s926 = smul.addr %s923, 2
        %s927 = sadd.s32 %s925, %s926
        %s928 = scalar_lea.vmem %s9, %s927
      $region72: #{net_forward.1} parent=63 // pred_fallthru
        _
    $region64: #{net_forward.1} parent=5 // pred_fallthru
      _
  $region6: #{net_forward.1} parent=0 // loop_footer
    %s22 = sadd.s32 1, %s18
  $region7: #{net_forward.1} parent=0 // loop_footer_branch
    %17 = sbr.rel target = $region3
  $region8: #{net_forward.1} parent=0 // loop_exit
    _

</llo_original>
